<compile_context>
chip_gen: v5e
topology: v5e:2x2
jax: 0.10.0
libtpu: 0.0.40
codegen_flags: <defaults>
</compile_context>

<pallas_src>
import jax
import jax.numpy as jnp
from jax.experimental import pallas as pl
from jax.experimental.pallas import tpu as pltpu


def _spatial_embedding_kernel(x_ref, emb_ref, o_ref):
    # x_ref:   (1, tn, P*D)  one batch item, tn nodes, lane-dense last axis
    # emb_ref: (tn, P*D)     matching node tile of the pre-tiled embedding
    # o_ref:   (1, tn, P*D)
    o_ref[...] = x_ref[...] + emb_ref[...][None, :, :]


def _choose_node_tile(num_nodes, lane_width, itemsize, target_bytes=2 << 20):
    """Pick a node-axis tile: ~target_bytes per x/out tile, sublane-aligned."""
    row_bytes = max(lane_width * itemsize, 1)
    tn = max(1, target_bytes // row_bytes)
    if tn >= num_nodes:
        return num_nodes          # full extent always satisfies the (8,128) rule
    tn = max(8, (tn // 8) * 8)    # multiple of 8 (sublane) when tiling
    return min(tn, num_nodes)


def spatial_embedding(x, node_embedding, *, dropout_rate=0.1, training=False):
    """x: (batch, num_nodes, patch_num, d_model); node_embedding: (num_nodes, d_model)."""
    if training and dropout_rate > 0.0:
        # TODO(synk): implement stochastic dropout with pltpu.prng_seed/prng_random_bits.
        raise NotImplementedError("training-mode dropout not implemented (eval only)")

    batch, num_nodes, patch_num, d_model = x.shape
    lane = patch_num * d_model
    itemsize = jnp.dtype(x.dtype).itemsize

    # Lane-dense fold of the input: last axis becomes P*D.
    x_folded = x.reshape(batch, num_nodes, lane)

    # Pre-tile the embedding over patch_num once in XLA (tiny), matching the
    # folded lane layout [p0 d0..dD-1, p1 d0..dD-1, ...]. Pin dtype to x's.
    emb = node_embedding.astype(x.dtype)
    emb_folded = jnp.broadcast_to(
        emb[:, None, :], (num_nodes, patch_num, d_model)
    ).reshape(num_nodes, lane)

    tn = _choose_node_tile(num_nodes, lane, itemsize)
    grid = (batch, pl.cdiv(num_nodes, tn))

    n_elems = batch * num_nodes * lane
    cost = pl.CostEstimate(
        flops=n_elems,
        transcendentals=0,
        bytes_accessed=(2 * n_elems + num_nodes * lane) * itemsize,
    )

    out_folded = pl.pallas_call(
        _spatial_embedding_kernel,
        out_shape=jax.ShapeDtypeStruct((batch, num_nodes, lane), x.dtype),
        grid_spec=pltpu.PrefetchScalarGridSpec(
            num_scalar_prefetch=0,
            grid=grid,
            in_specs=[
                # x: one batch item x one node tile per grid step
                pl.BlockSpec((1, tn, lane), lambda b, n: (b, n, 0)),
                # embedding: only the matching node tile (not the full table)
                pl.BlockSpec((tn, lane), lambda b, n: (n, 0)),
            ],
            out_specs=pl.BlockSpec((1, tn, lane), lambda b, n: (b, n, 0)),
        ),
        compiler_params=pltpu.CompilerParams(
            # Both axes independent -> shard across v7x's 2 TensorCores.
            dimension_semantics=("parallel", "parallel"),
            # ~6x a 2 MiB tile << 32 MiB scoped budget; safe on v5e/v6e/v7x.
            vmem_limit_bytes=32 * 1024 * 1024,
        ),
        cost_estimate=cost,
    )(x_folded, emb_folded)

    return out_folded.reshape(batch, num_nodes, patch_num, d_model)


if __name__ == "__main__":
    # Small shapes consistent with the module's forward.
    batch, num_nodes, patch_num, d_model = 2, 4, 8, 32

    key = jax.random.PRNGKey(0)
    kx, ke = jax.random.split(key)

    x = jax.random.normal(kx, (batch, num_nodes, patch_num, d_model),
                          dtype=jnp.float32)
    # Deterministic param init matching nn.init.uniform_(-0.02, 0.02)
    node_embedding = jax.random.uniform(
        ke, (num_nodes, d_model), dtype=jnp.float32,
        minval=-0.02, maxval=0.02)

    out = spatial_embedding(x, node_embedding)
    out = jax.block_until_ready(out)

    # Reference check in plain JAX.
    ref = x + node_embedding[None, :, None, :]
    assert out.shape == x.shape
    assert jnp.allclose(out, ref, atol=1e-6), "mismatch vs reference"

    print("KERNEL_OK")
</pallas_src>

<mosaic_0001>
module attributes {stable_mosaic.version = 11 : i64} {
  func.func @_spatial_embedding_kernel(%arg0: i32, %arg1: i32, %arg2: memref<1x4x256xf32, #tpu.memory_space<vmem>>, %arg3: memref<4x256xf32, #tpu.memory_space<vmem>>, %arg4: memref<1x4x256xf32, #tpu.memory_space<vmem>>) attributes {dimension_semantics = [#tpu.dimension_semantics<parallel>, #tpu.dimension_semantics<parallel>], iteration_bounds = array<i64: 2, 1>, scalar_prefetch = 0 : i64, scratch_operands = 0 : i64, tpu.core_type = #tpu.core_type<tc>, window_params = [{transform_indices = @transform_0, window_bounds = array<i64: 1, 4, 256>}, {transform_indices = @transform_1, window_bounds = array<i64: 4, 256>}, {transform_indices = @transform_2, window_bounds = array<i64: 1, 4, 256>}]} {
    %c0 = arith.constant 0 : index
    %c0_0 = arith.constant 0 : index
    %c0_1 = arith.constant 0 : index
    %0 = vector.load %arg2[%c0, %c0_0, %c0_1] : memref<1x4x256xf32, #tpu.memory_space<vmem>>, vector<1x4x256xf32>
    %c0_2 = arith.constant 0 : index
    %c0_3 = arith.constant 0 : index
    %1 = vector.load %arg3[%c0_2, %c0_3] : memref<4x256xf32, #tpu.memory_space<vmem>>, vector<4x256xf32>
    %2 = vector.shape_cast %1 : vector<4x256xf32> to vector<1x4x256xf32>
    %3 = arith.addf %0, %2 : vector<1x4x256xf32>
    %c0_4 = arith.constant 0 : index
    %c0_5 = arith.constant 0 : index
    %c0_6 = arith.constant 0 : index
    %4 = vector.load %arg4[%c0_4, %c0_5, %c0_6] : memref<1x4x256xf32, #tpu.memory_space<vmem>>, vector<1x4x256xf32>
    tpu.vector_store %arg4[%c0_4, %c0_5, %c0_6], %3 {strides = array<i32>} : memref<1x4x256xf32, #tpu.memory_space<vmem>>, vector<1x4x256xf32>,
    return
  }
  func.func @transform_0(%arg0: i32, %arg1: i32) -> (i32, i32, i32) {
    %c0_i32 = arith.constant 0 : i32
    %c0_i32_0 = arith.constant 0 : i32
    return %arg0, %arg1, %c0_i32 : i32, i32, i32
  }
  func.func @transform_1(%arg0: i32, %arg1: i32) -> (i32, i32) {
    %c0_i32 = arith.constant 0 : i32
    %c0_i32_0 = arith.constant 0 : i32
    return %arg1, %c0_i32 : i32, i32
  }
  func.func @transform_2(%arg0: i32, %arg1: i32) -> (i32, i32, i32) {
    %c0_i32 = arith.constant 0 : i32
    %c0_i32_0 = arith.constant 0 : i32
    return %arg0, %arg1, %c0_i32 : i32, i32, i32
  }
}

</mosaic_0001>

<llo_original>
// kernel: tpu_custom_call.1
$region0: #{tpu_custom_call.1}
  #allocation0 [shape = 'u32[]', space=smem, size = 0x4, offset = 0x4, fixed_abs, tag = 'smem constant byte address 0x4 - core index']
  #allocation1 [shape = 'u32[72,128]{1,0:T(1,128)}', space=vmem, size = 0x9000, scoped, tag = 'internal scratch']
  %s0 = inlined_call_operand.hbm [shape: f32[2,4,256], index: 0, kind: input, shape index: {}]
  %s1 = inlined_call_operand.hbm [shape: f32[4,256], index: 1, kind: input, shape index: {}]
  %s2 = inlined_call_operand.hbm [shape: f32[2,4,256], index: 2, kind: output, shape index: {}]
  %s3 = sld [smem:[#allocation0]]
  $region49: #{tpu_custom_call.1} parent=0
    _
  %s5 = ssub.s32 1, %s3
  %s6 = scalar_select 0, %s5, %s3
  $region1: #{tpu_custom_call.1} parent=0
    #allocation2 [shape = 'u8[8192]{0}', space=vmem, size = 0x2000, scoped, tag = 'input window, operand 0']
    #allocation3 [shape = 's32[2]{0}', space=sflag, size = 0x8, scoped, tag = 'scoped memory for tpu_custom_call.1']
    #allocation4 [shape = 's32[2]{0}', space=sflag, size = 0x8, scoped, tag = 'scoped memory for tpu_custom_call.1']
    #allocation5 [shape = 'u8[4096]{0}', space=vmem, size = 0x1000, scoped, tag = 'input window, operand 1, single buffered']
    #allocation6 [shape = 's32[1]{0}', space=sflag, size = 0x4, scoped, tag = 'scoped memory for tpu_custom_call.1']
    #allocation7 [shape = 'u8[8192]{0}', space=vmem, size = 0x2000, scoped, tag = 'output window, operand 0']
    %7 = vsyncpa [#allocation3], 0
    %s8 = scalar_lea.sflag [#allocation3], 1
    %9 = vsyncpa %s8, 0
    %10 = vsyncpa [#allocation6], 0
    %11 = vsyncpa [#allocation4], 0
    %s12 = scalar_lea.sflag [#allocation4], 1
    %13 = vsyncpa %s12, 0
    loop: start=0, step=1, limit=4
    $region2: #{tpu_custom_call.1} parent=1 // loop_pre_header
      _
    $region3: #{tpu_custom_call.1} parent=1 // loop_header
      %s15 = sphi 0, %s19
      %p16 = scmp.ge.s32.totalorder %s15, 4
      %s22 = sphi 0, %s34
      %s23 = sphi 0, %s30
      %s24 = sphi 0, %s22
      %s25 = sphi 0, %s23
      %s26 = sphi 0, %s24
      %s27 = sphi 0, %s25
      %s39 = sphi 0, %s41
      %s42 = sphi 0, %s39
      %s43 = sphi 0, %s42
      %s59 = sphi 0, %s43
      %s65 = sphi 0, %s67
      %s68 = sphi 0, %s65
      %s69 = sphi 0, %s68
      %s85 = sphi 0, %s69
      %s93 = sphi 0, %s95
      %s96 = sphi 0, %s93
      %s97 = sphi 0, %s96
      %s113 = sphi 0, %s97
    $region4: #{tpu_custom_call.1} parent=1 // loop_header_branch
      %18 = sbr.rel (%p16) target = $region8
    $region5: #{tpu_custom_call.1} parent=1 // loop_body
      %s20 = ssub.s32 %s15, 1
      %s21 = ssub.s32 %s15, 2
      %s28 = sadd.s32 1, %s23
      %p29 = scmp.ge.s32.totalorder %s28, 1
      %s30 = scalar_select %p29, 0, %s28
      %s31 = sadd.s32 1, %s22
      %s32 = scalar_select %p29, %s31, %s22
      %p33 = scmp.ge.s32.totalorder %s32, 2
      %s34 = scalar_select %p33, 0, %s32
      %s35 = ssub.s32 %s22, %s34
      %s36 = ssub.s32 %s23, %s30
      %s37 = sor.u32 %s35, %s36
      %p38 = scmp.eq.s32.totalorder %s37, 0
      %s40 = sadd.s32 %s39, 1
      %s41 = scalar_select %p38, %s39, %s40
      %p44 = pneg %p38
      %p45 = scmp.eq.s32.totalorder %s15, 1
      %p46 = por %p44, %p45
      %p47 = scmp.ne.s32.totalorder %s39, %s42
      %p48 = scmp.eq.s32.totalorder %s15, 0
      %p49 = por %p47, %p48
      %p50 = scmp.ne.s32.totalorder %s39, %s42
      %p51 = scmp.eq.s32.totalorder %s20, 1
      %p52 = por %p50, %p51
      %p53 = scmp.ne.s32.totalorder %s42, %s43
      %p54 = scmp.eq.s32.totalorder %s20, 0
      %p55 = por %p53, %p54
      %p56 = scmp.ne.s32.totalorder %s42, %s43
      %p57 = scmp.eq.s32.totalorder %s21, 1
      %p58 = por %p56, %p57
      %p60 = scmp.ne.s32.totalorder %s43, %s59
      %p61 = scmp.eq.s32.totalorder %s21, 0
      %p62 = por %p60, %p61
      %s63 = ssub.s32 %s23, %s30
      %p64 = scmp.eq.s32.totalorder %s63, 0
      %s66 = sadd.s32 %s65, 1
      %s67 = scalar_select %p64, %s65, %s66
      %p70 = pneg %p64
      %p71 = scmp.eq.s32.totalorder %s15, 1
      %p72 = por %p70, %p71
      %p73 = scmp.ne.s32.totalorder %s65, %s68
      %p74 = scmp.eq.s32.totalorder %s15, 0
      %p75 = por %p73, %p74
      %p76 = scmp.ne.s32.totalorder %s65, %s68
      %p77 = scmp.eq.s32.totalorder %s20, 1
      %p78 = por %p76, %p77
      %p79 = scmp.ne.s32.totalorder %s68, %s69
      %p80 = scmp.eq.s32.totalorder %s20, 0
      %p81 = por %p79, %p80
      %p82 = scmp.ne.s32.totalorder %s68, %s69
      %p83 = scmp.eq.s32.totalorder %s21, 1
      %p84 = por %p82, %p83
      %p86 = scmp.ne.s32.totalorder %s69, %s85
      %p87 = scmp.eq.s32.totalorder %s21, 0
      %p88 = por %p86, %p87
      %s89 = ssub.s32 %s22, %s34
      %s90 = ssub.s32 %s23, %s30
      %s91 = sor.u32 %s89, %s90
      %p92 = scmp.eq.s32.totalorder %s91, 0
      %s94 = sadd.s32 %s93, 1
      %s95 = scalar_select %p92, %s93, %s94
      %p98 = pneg %p92
      %p99 = scmp.eq.s32.totalorder %s15, 1
      %p100 = por %p98, %p99
      %p101 = scmp.ne.s32.totalorder %s93, %s96
      %p102 = scmp.eq.s32.totalorder %s15, 0
      %p103 = por %p101, %p102
      %p104 = scmp.ne.s32.totalorder %s93, %s96
      %p105 = scmp.eq.s32.totalorder %s20, 1
      %p106 = por %p104, %p105
      %p107 = scmp.ne.s32.totalorder %s96, %s97
      %p108 = scmp.eq.s32.totalorder %s20, 0
      %p109 = por %p107, %p108
      %p110 = scmp.ne.s32.totalorder %s96, %s97
      %p111 = scmp.eq.s32.totalorder %s21, 1
      %p112 = por %p110, %p111
      %p114 = scmp.ne.s32.totalorder %s97, %s113
      %p115 = scmp.eq.s32.totalorder %s21, 0
      %p116 = por %p114, %p115
      %p117 = scmp.le.s32.totalorder 1, %s15
      %p118 = scmp.lt.s32.totalorder %s15, 3
      %p119 = pnand %p117, %p118
      %p120 = pneg %p119
      // Predicated region
      $region9: #{tpu_custom_call.1} parent=5 // pred_check
        _
      $region10: #{tpu_custom_call.1} parent=5 // pred_check_branch
        %122 = sbr.rel (%p119) target = $region12
      $region11: #{tpu_custom_call.1} parent=5 // pred_region
        %s123 = ssub.s32 %s15, 1
        // Predicated region
        $region13: #{tpu_custom_call.1} parent=11 // pred_check
          %p124 = pneg %p81
        $region14: #{tpu_custom_call.1} parent=11 // pred_check_branch
          %126 = sbr.rel (%p124) target = $region16
        $region15: #{tpu_custom_call.1} parent=11 // pred_region
          %128 = vsyncadd [#allocation6], 0
          %s129 = smul.addr %s25, 2
          %s130 = smul.addr %s129, 4
          %s131 = scalar_lea.hbm %s1, %s130
          %s133 = sshll.u32 %s131, 4
          %s134 = int_to_ptr.hbm [resolvable:$true] %s133
          %s135 = sshll.u32 [#allocation5], 4
          %s136 = int_to_ptr.vmem [resolvable:$true] %s135
          %138 = dma.hbm_to_vmem [thread:$0]  %s134, 128, %s136, [#allocation6]
        $region16: #{tpu_custom_call.1} parent=11 // pred_fallthru
          _
      $region12: #{tpu_custom_call.1} parent=5 // pred_fallthru
        _
      %p139 = scmp.lt.s32.totalorder %s15, 2
      // Predicated region
      $region17: #{tpu_custom_call.1} parent=5 // pred_check
        %p140 = pneg %p139
      $region18: #{tpu_custom_call.1} parent=5 // pred_check_branch
        %142 = sbr.rel (%p140) target = $region20
      $region19: #{tpu_custom_call.1} parent=5 // pred_region
        // Predicated region
        $region21: #{tpu_custom_call.1} parent=19 // pred_check
          %p143 = pneg %p49
        $region22: #{tpu_custom_call.1} parent=19 // pred_check_branch
          %145 = sbr.rel (%p143) target = $region24
        $region23: #{tpu_custom_call.1} parent=19 // pred_region
          %s146 = sand.u32 %s39, 1
          %s147 = scalar_lea.sflag [#allocation3], %s146
          %s148 = sand.u32 %s39, 1
          %s149 = smul.addr %s148, 8
          %s150 = scalar_lea.vmem [#allocation2], %s149
          %152 = vsyncadd %s147, 0
          %s153 = smul.addr %s23, 2
          %s154 = smul.addr %s22, 2
          %s155 = sadd.s32 %s153, %s154
          %s156 = smul.addr %s155, 4
          %s157 = scalar_lea.hbm %s0, %s156
          %s159 = sshll.u32 %s157, 4
          %s160 = int_to_ptr.hbm [resolvable:$true] %s159
          %s161 = sshll.u32 %s150, 4
          %s162 = int_to_ptr.vmem [resolvable:$true] %s161
          %164 = dma.hbm_to_vmem [thread:$0]  %s160, 128, %s162, %s147
        $region24: #{tpu_custom_call.1} parent=19 // pred_fallthru
          _
      $region20: #{tpu_custom_call.1} parent=5 // pred_fallthru
        _
      %p165 = scmp.le.s32.totalorder 1, %s15
      %p166 = scmp.lt.s32.totalorder %s15, 3
      %p167 = pnand %p165, %p166
      %p168 = pneg %p167
      // Predicated region
      $region25: #{tpu_custom_call.1} parent=5 // pred_check
        _
      $region26: #{tpu_custom_call.1} parent=5 // pred_check_branch
        %170 = sbr.rel (%p167) target = $region28
      $region27: #{tpu_custom_call.1} parent=5 // pred_region
        %s171 = ssub.s32 %s15, 1
        %s172 = sand.u32 %s42, 1
        %s173 = scalar_lea.sflag [#allocation3], %s172
        %s174 = sand.u32 %s42, 1
        %s175 = smul.addr %s174, 8
        %s176 = scalar_lea.vmem [#allocation2], %s175
        // Predicated region
        $region29: #{tpu_custom_call.1} parent=27 // pred_check
          %p177 = pneg %p55
        $region30: #{tpu_custom_call.1} parent=27 // pred_check_branch
          %179 = sbr.rel (%p177) target = $region32
        $region31: #{tpu_custom_call.1} parent=27 // pred_region
          %181 = dma.done %s173, 128
        $region32: #{tpu_custom_call.1} parent=27 // pred_fallthru
          _
        // Predicated region
        $region33: #{tpu_custom_call.1} parent=27 // pred_check
          %p182 = pneg %p81
        $region34: #{tpu_custom_call.1} parent=27 // pred_check_branch
          %184 = sbr.rel (%p182) target = $region36
        $region35: #{tpu_custom_call.1} parent=27 // pred_region
          %186 = dma.done [#allocation6], 128
        $region36: #{tpu_custom_call.1} parent=27 // pred_fallthru
          _
        %s187 = sand.u32 %s42, 1
        %s188 = scalar_lea.sflag [#allocation3], %s187
        %s189 = sand.u32 %s42, 1
        %s190 = smul.addr %s189, 8
        %s191 = scalar_lea.vmem [#allocation2], %s190
        %p192 = pneg %p55
        %p193 = pneg %p52
        %p194 = pneg %p81
        %p195 = pneg %p78
        %p196 = pneg %p109
        %p197 = pneg %p106
        %s198 = sand.u32 %s96, 1
        %s199 = scalar_lea.sflag [#allocation4], %s198
        %s200 = sand.u32 %s96, 1
        %s201 = smul.addr %s200, 8
        %s202 = scalar_lea.vmem [#allocation7], %s201
        %v203 = vld [vmem:[%s176] sm:$0xff]
        %v204 = vld [vmem:[#allocation5] sm:$0xff]
        %v205 = vadd.f32 %v203, %v204
        %206 = vst [vmem:[%s202] sm:$0xff] %v205
        %s207 = sand.u32 %s96, 1
        %s208 = scalar_lea.sflag [#allocation4], %s207
        %s209 = sand.u32 %s96, 1
        %s210 = smul.addr %s209, 8
        %s211 = scalar_lea.vmem [#allocation7], %s210
        // Predicated region
        $region37: #{tpu_custom_call.1} parent=27 // pred_check
          %p212 = pneg %p106
        $region38: #{tpu_custom_call.1} parent=27 // pred_check_branch
          %214 = sbr.rel (%p212) target = $region40
        $region39: #{tpu_custom_call.1} parent=27 // pred_region
          %216 = vsyncadd %s208, 0
          %s217 = smul.addr %s25, 2
          %s218 = smul.addr %s24, 2
          %s219 = sadd.s32 %s217, %s218
          %s220 = smul.addr %s219, 4
          %s221 = scalar_lea.hbm %s2, %s220
          %s223 = sshll.u32 %s211, 4
          %s224 = int_to_ptr.vmem [resolvable:$true] %s223
          %s225 = sshll.u32 %s221, 4
          %s226 = int_to_ptr.hbm [resolvable:$true] %s225
          %228 = dma.vmem_to_hbm [thread:$0]  %s224, 128, %s226, %s208
        $region40: #{tpu_custom_call.1} parent=27 // pred_fallthru
          _
      $region28: #{tpu_custom_call.1} parent=5 // pred_fallthru
        _
      %p229 = scmp.le.s32.totalorder 2, %s15
      // Predicated region
      $region41: #{tpu_custom_call.1} parent=5 // pred_check
        %p230 = pneg %p229
      $region42: #{tpu_custom_call.1} parent=5 // pred_check_branch
        %232 = sbr.rel (%p230) target = $region44
      $region43: #{tpu_custom_call.1} parent=5 // pred_region
        %s233 = ssub.s32 %s15, 2
        // Predicated region
        $region45: #{tpu_custom_call.1} parent=43 // pred_check
          %p234 = pneg %p112
        $region46: #{tpu_custom_call.1} parent=43 // pred_check_branch
          %236 = sbr.rel (%p234) target = $region48
        $region47: #{tpu_custom_call.1} parent=43 // pred_region
          %s237 = sand.u32 %s97, 1
          %s238 = scalar_lea.sflag [#allocation4], %s237
          %s239 = sand.u32 %s97, 1
          %s240 = smul.addr %s239, 8
          %s241 = scalar_lea.vmem [#allocation7], %s240
          %243 = dma.done %s238, 128
        $region48: #{tpu_custom_call.1} parent=43 // pred_fallthru
          _
      $region44: #{tpu_custom_call.1} parent=5 // pred_fallthru
        _
    $region6: #{tpu_custom_call.1} parent=1 // loop_footer
      %s19 = sadd.s32 1, %s15
    $region7: #{tpu_custom_call.1} parent=1 // loop_footer_branch
      %14 = sbr.rel target = $region3
    $region8: #{tpu_custom_call.1} parent=1 // loop_exit
      _
    %244 = vsyncpa [#allocation3], 1
    %s245 = scalar_lea.sflag [#allocation3], 1
    %246 = vsyncpa %s245, 1
    %247 = vsyncpa [#allocation6], 1
    %248 = vsyncpa [#allocation4], 1
    %s249 = scalar_lea.sflag [#allocation4], 1
    %250 = vsyncpa %s249, 1

</llo_original>
